<compile_context>
chip_gen: v7x
topology: tpu7x:2x2x1
jax: 0.10.0
libtpu: 0.0.40
codegen_flags: <defaults>
</compile_context>

<pallas_src>
import numpy as np
import jax
import jax.numpy as jnp
from jax.experimental import pallas as pl
from jax.experimental.pallas import tpu as pltpu

_LANE = 128
_MIB = 1024 * 1024


# ---------------------------------------------------------------------------
# Tiling helpers
# ---------------------------------------------------------------------------

def _sublane_min(dtype) -> int:
    """Minimum legal row-tile multiple for a dtype (f32:8, bf16:16, int8:32)."""
    itemsize = np.dtype(dtype).itemsize
    return max(8, 32 // max(itemsize, 1))


def _vmem_physical_bytes() -> int:
    try:
        return int(pltpu.get_tpu_info().vmem_capacity_bytes)
    except Exception:  # pragma: no cover - query unavailable
        return 64 * _MIB


def _vmem_budget_bytes() -> int:
    """Tile budget: ~cap/8 (8 MiB on v7x's 64 MiB, 16 MiB on v5e/v6e's 128 MiB)."""
    cap = _vmem_physical_bytes()
    return int(min(32 * _MIB, max(8 * _MIB, cap // 8)))


def _vmem_limit_bytes(bytes_per_row: int, block_rows: int) -> int:
    """Explicit scoped-VMEM limit: real footprint x2 + headroom, within physical."""
    actual = bytes_per_row * block_rows
    cap = _vmem_physical_bytes()
    return int(min(cap // 2, max(32 * _MIB, 2 * actual + 4 * _MIB)))


def _choose_block_rows(n_rows: int, bytes_per_row: int, sub: int,
                       *, min_grid: int = 2) -> int:
    """Largest row tile (multiple of `sub`) fitting the VMEM budget.

    `bytes_per_row` must already account for every live (double-buffered)
    tile in the kernel.  Keeps >= `min_grid` grid steps when possible so the
    leading parallel axis can shard across v7x's two TensorCores.
    """
    if n_rows <= sub:
        return int(n_rows)  # full-extent block is always legal
    budget = _vmem_budget_bytes()
    cap_rows = budget // max(bytes_per_row, 1)
    cap_rows = max(sub, (cap_rows // sub) * sub)
    target = pl.cdiv(n_rows, min_grid)
    target = max(sub, pl.cdiv(target, sub) * sub)
    return int(min(cap_rows, target))


def _pad_lanes(a):
    """Pad the last dim up to a multiple of 128 for unmasked lane-dense stores."""
    w = a.shape[-1]
    wp = pl.cdiv(w, _LANE) * _LANE
    if wp == w:
        return a
    pad = [(0, 0)] * (a.ndim - 1) + [(0, wp - w)]
    return jnp.pad(a, pad)


# ---------------------------------------------------------------------------
# Kernels
# ---------------------------------------------------------------------------

def _materialize_kernel(pos_ref, out_ref):
    # Pure materialization: forward() returns the parameter unchanged.
    out_ref[...] = pos_ref[...]


def _add_pos_emb_kernel(x_ref, pos_ref, out_ref):
    # x_ref/out_ref are (block_rows, width) thanks to pl.Squeezed() on batch.
    # Cast handles mixed dtypes (e.g. bf16 activations + f32 table).
    out_ref[...] = (x_ref[...] + pos_ref[...]).astype(out_ref.dtype)


# ---------------------------------------------------------------------------
# Wrappers
# ---------------------------------------------------------------------------

def position_embedding_forward(pos_emb, *, block_rows=None):
    """Materialize the (input_dims, width) table via a Pallas identity kernel.

    Normally just use the parameter directly (forward()); this exists only
    when an explicit kernel boundary is required.
    """
    rows, width = pos_emb.shape
    pos_p = _pad_lanes(pos_emb)
    width_p = pos_p.shape[-1]

    itemsize = np.dtype(pos_emb.dtype).itemsize
    sub = _sublane_min(pos_emb.dtype)
    # Live tiles per step: input + output, each double-buffered -> 4 buffers.
    bytes_per_row = 4 * width_p * itemsize
    if block_rows is None:
        block_rows = _choose_block_rows(rows, bytes_per_row, sub)

    spec = pl.BlockSpec((block_rows, width_p), lambda i: (i, 0))
    out = pl.pallas_call(
        _materialize_kernel,
        out_shape=jax.ShapeDtypeStruct((rows, width_p), pos_emb.dtype),
        grid=(pl.cdiv(rows, block_rows),),
        in_specs=[spec],
        out_specs=spec,
        compiler_params=pltpu.CompilerParams(
            dimension_semantics=("parallel",),
            vmem_limit_bytes=_vmem_limit_bytes(bytes_per_row, block_rows)),
    )(pos_p)
    return out[:, :width] if width_p != width else out


def add_position_embedding(x, pos_emb, *, block_rows=None):
    """Fused consumer kernel: out[b] = x[b] + pos_emb (recommended hot path).

    x: (batch, input_dims, width); pos_emb: (input_dims, width).
    Grid is (row_tiles, batch) with batch innermost so the pos_emb tile's
    block index is unchanged across consecutive steps and Pallas skips its
    re-DMA: pos_emb is read from HBM once per row tile, not once per (b, i).
    """
    batch, rows, width = x.shape
    assert pos_emb.shape == (rows, width), (pos_emb.shape, (rows, width))

    x_p = _pad_lanes(x)
    pos_p = _pad_lanes(pos_emb)
    width_p = x_p.shape[-1]

    x_item = np.dtype(x.dtype).itemsize
    p_item = np.dtype(pos_emb.dtype).itemsize
    sub = max(_sublane_min(x.dtype), _sublane_min(pos_emb.dtype))
    # Live tiles per step: x-in, pos-in, out — each double-buffered -> 6 buffers.
    bytes_per_row = 2 * width_p * (2 * x_item + p_item)
    if block_rows is None:
        block_rows = _choose_block_rows(rows, bytes_per_row, sub)

    grid = (pl.cdiv(rows, block_rows), batch)  # batch innermost
    x_spec = pl.BlockSpec((pl.Squeezed(), block_rows, width_p),
                          lambda i, b: (b, i, 0))
    pos_spec = pl.BlockSpec((block_rows, width_p), lambda i, b: (i, 0))

    out = pl.pallas_call(
        _add_pos_emb_kernel,
        out_shape=jax.ShapeDtypeStruct((batch, rows, width_p), x.dtype),
        grid=grid,
        in_specs=[x_spec, pos_spec],
        out_specs=x_spec,
        compiler_params=pltpu.CompilerParams(
            dimension_semantics=("parallel", "arbitrary"),
            vmem_limit_bytes=_vmem_limit_bytes(bytes_per_row, block_rows)),
    )(x_p, pos_p)
    return out[:, :, :width] if width_p != width else out


class PositionEmbeddingJAX:
    """JAX/Pallas port of jukebox PositionEmbedding (pos_init=False)."""

    def __init__(self, input_shape, width, init_scale=1.0, key=None):
        self.input_shape = tuple(input_shape)
        self.input_dims = int(np.prod(input_shape))
        self.width = int(width)
        if key is None:
            key = jax.random.PRNGKey(0)
        std = 0.01 * init_scale  # get_normal(input_dims, width, std=0.01*init_scale)
        self.pos_emb = std * jax.random.normal(
            key, (self.input_dims, self.width), dtype=jnp.float32)

    def forward(self, *, materialize=False):
        if materialize:
            # Explicit Pallas kernel boundary (identity copy, large tiles).
            return position_embedding_forward(self.pos_emb)
        # Fast path: forward() is the parameter itself — zero HBM traffic.
        return self.pos_emb

    def add_to(self, x):
        # Fused x + pos_emb, the pattern used by the transformer prior.
        return add_position_embedding(x, self.pos_emb)


if __name__ == "__main__":
    key = jax.random.PRNGKey(0)
    k_emb, k_x, k_emb2, k_x2 = jax.random.split(key, 4)

    # Small shapes consistent with the module: input_shape=(2, 8) -> 16
    # positions, hidden width 128 (lane-aligned).
    module = PositionEmbeddingJAX(input_shape=(2, 8), width=128,
                                  init_scale=1.0, key=k_emb)
    ref = np.asarray(module.pos_emb)

    # (a) Default path: forward() == the parameter (matches PyTorch exactly).
    out_direct = jax.block_until_ready(module.forward())
    np.testing.assert_array_equal(np.asarray(out_direct), ref)

    # (b) Explicit Pallas materialization (cdiv grid, large row tiles).
    out_kernel = jax.block_until_ready(module.forward(materialize=True))
    np.testing.assert_array_equal(np.asarray(out_kernel), ref)
    assert out_kernel.shape == (module.input_dims, module.width)
    assert out_kernel.dtype == jnp.float32

    # (c) Fused consumer path: x + pos_emb in a single kernel, batch-innermost
    #     grid so pos_emb is DMA'd once per row tile.
    batch = 2
    x = jax.random.normal(k_x, (batch, module.input_dims, module.width),
                          dtype=jnp.float32)
    y = jax.block_until_ready(module.add_to(x))
    np.testing.assert_allclose(np.asarray(y), np.asarray(x) + ref[None, :, :],
                               rtol=1e-6, atol=1e-6)

    # (d) Mixed dtypes: bf16 activations + f32 table (cast handled in-kernel).
    x_bf16 = x.astype(jnp.bfloat16)
    y_bf16 = jax.block_until_ready(add_position_embedding(x_bf16, module.pos_emb))
    ref_bf16 = jax.block_until_ready(
        (x_bf16.astype(jnp.float32) + module.pos_emb[None, :, :]).astype(jnp.bfloat16))
    np.testing.assert_array_equal(np.asarray(y_bf16), np.asarray(ref_bf16))

    # (e) Non-128-aligned width -> lane-padding path (pad + slice back).
    module2 = PositionEmbeddingJAX(input_shape=(2, 8), width=96,
                                   init_scale=1.0, key=k_emb2)
    ref2 = np.asarray(module2.pos_emb)
    out2 = jax.block_until_ready(module2.forward(materialize=True))
    np.testing.assert_array_equal(np.asarray(out2), ref2)
    x2 = jax.random.normal(k_x2, (batch, module2.input_dims, module2.width),
                           dtype=jnp.float32)
    y2 = jax.block_until_ready(module2.add_to(x2))
    np.testing.assert_allclose(np.asarray(y2), np.asarray(x2) + ref2[None, :, :],
                               rtol=1e-6, atol=1e-6)

    print("KERNEL_OK")
</pallas_src>

<mosaic_0001>
module attributes {stable_mosaic.version = 11 : i64} {
  func.func @_materialize_kernel(%arg0: i32, %arg1: memref<8x128xf32, #tpu.memory_space<vmem>>, %arg2: memref<8x128xf32, #tpu.memory_space<vmem>>) attributes {dimension_semantics = [#tpu.dimension_semantics<parallel>], iteration_bounds = array<i64: 2>, scalar_prefetch = 0 : i64, scratch_operands = 0 : i64, tpu.core_type = #tpu.core_type<tc>, window_params = [{transform_indices = @transform_0, window_bounds = array<i64: 8, 128>}, {transform_indices = @transform_1, window_bounds = array<i64: 8, 128>}]} {
    %c0 = arith.constant 0 : index
    %c0_0 = arith.constant 0 : index
    %0 = vector.load %arg1[%c0, %c0_0] : memref<8x128xf32, #tpu.memory_space<vmem>>, vector<8x128xf32>
    %c0_1 = arith.constant 0 : index
    %c0_2 = arith.constant 0 : index
    %1 = vector.load %arg2[%c0_1, %c0_2] : memref<8x128xf32, #tpu.memory_space<vmem>>, vector<8x128xf32>
    tpu.vector_store %arg2[%c0_1, %c0_2], %0 {strides = array<i32>} : memref<8x128xf32, #tpu.memory_space<vmem>>, vector<8x128xf32>,
    return
  }
  func.func @transform_0(%arg0: i32) -> (i32, i32) {
    %c0_i32 = arith.constant 0 : i32
    %c0_i32_0 = arith.constant 0 : i32
    return %arg0, %c0_i32 : i32, i32
  }
  func.func @transform_1(%arg0: i32) -> (i32, i32) {
    %c0_i32 = arith.constant 0 : i32
    %c0_i32_0 = arith.constant 0 : i32
    return %arg0, %c0_i32 : i32, i32
  }
}

</mosaic_0001>

<llo_original>
// kernel: tpu_custom_call.1
$region0: #{tpu_custom_call.1}
  #allocation0 [shape = 'u32[]', space=smem, size = 0x4, offset = 0x4, fixed_abs, tag = 'smem constant byte address 0x4 - core index']
  #allocation1 [shape = 'u32[144,128]{1,0:T(1,128)}', space=vmem, size = 0x12000, scoped, tag = 'internal scratch']
  %s0 = inlined_call_operand.hbm [shape: f32[16,128], index: 0, kind: input, shape index: {}]
  %s1 = inlined_call_operand.hbm [shape: f32[16,128], index: 1, kind: output, shape index: {}]
  %s2 = sld [smem:[#allocation0]]
  $region41: #{tpu_custom_call.1} parent=0
    _
  %s4 = ssub.s32 1, %s2
  %s5 = scalar_select 0, %s4, %s2
  $region1: #{tpu_custom_call.1} parent=0
    #allocation2 [shape = 'u8[8192]{0}', space=vmem, size = 0x2000, scoped, tag = 'input window, operand 0']
    #allocation3 [shape = 's32[2]{0}', space=sflag, size = 0x8, scoped, tag = 'scoped memory for tpu_custom_call.1']
    #allocation4 [shape = 's32[2]{0}', space=sflag, size = 0x8, scoped, tag = 'scoped memory for tpu_custom_call.1']
    #allocation5 [shape = 'u8[8192]{0}', space=vmem, size = 0x2000, scoped, tag = 'output window, operand 0']
    %6 = vsyncpa [#allocation3], 0
    %s7 = scalar_lea.sflag [#allocation3], 1
    %8 = vsyncpa %s7, 0
    %9 = vsyncpa [#allocation4], 0
    %s10 = scalar_lea.sflag [#allocation4], 1
    %11 = vsyncpa %s10, 0
    loop: start=0, step=1, limit=4
    $region2: #{tpu_custom_call.1} parent=1 // loop_pre_header
      _
    $region3: #{tpu_custom_call.1} parent=1 // loop_header
      %s13 = sphi 0, %s17
      %p14 = scmp.ge.s32.totalorder %s13, 4
      %s23 = sphi 0, %s25
      %s26 = sphi 0, %s23
      %s27 = sphi 0, %s26
      %s43 = sphi 0, %s27
      %s49 = sphi 0, %s51
      %s52 = sphi 0, %s49
      %s53 = sphi 0, %s52
      %s69 = sphi 0, %s53
    $region4: #{tpu_custom_call.1} parent=1 // loop_header_branch
      %16 = sbr.rel (%p14) target = $region8
    $region5: #{tpu_custom_call.1} parent=1 // loop_body
      %s18 = ssub.s32 %s13, 1
      %s19 = ssub.s32 %s13, 2
      %s20 = sadd.s32 %s13, 1
      %s21 = ssub.s32 %s13, %s20
      %p22 = scmp.eq.s32.totalorder %s21, 0
      %s24 = sadd.s32 %s23, 1
      %s25 = scalar_select %p22, %s23, %s24
      %p28 = pneg %p22
      %p29 = scmp.eq.s32.totalorder %s13, 1
      %p30 = por %p28, %p29
      %p31 = scmp.ne.s32.totalorder %s23, %s26
      %p32 = scmp.eq.s32.totalorder %s13, 0
      %p33 = por %p31, %p32
      %p34 = scmp.ne.s32.totalorder %s23, %s26
      %p35 = scmp.eq.s32.totalorder %s18, 1
      %p36 = por %p34, %p35
      %p37 = scmp.ne.s32.totalorder %s26, %s27
      %p38 = scmp.eq.s32.totalorder %s18, 0
      %p39 = por %p37, %p38
      %p40 = scmp.ne.s32.totalorder %s26, %s27
      %p41 = scmp.eq.s32.totalorder %s19, 1
      %p42 = por %p40, %p41
      %p44 = scmp.ne.s32.totalorder %s27, %s43
      %p45 = scmp.eq.s32.totalorder %s19, 0
      %p46 = por %p44, %p45
      %s47 = ssub.s32 %s13, %s20
      %p48 = scmp.eq.s32.totalorder %s47, 0
      %s50 = sadd.s32 %s49, 1
      %s51 = scalar_select %p48, %s49, %s50
      %p54 = pneg %p48
      %p55 = scmp.eq.s32.totalorder %s13, 1
      %p56 = por %p54, %p55
      %p57 = scmp.ne.s32.totalorder %s49, %s52
      %p58 = scmp.eq.s32.totalorder %s13, 0
      %p59 = por %p57, %p58
      %p60 = scmp.ne.s32.totalorder %s49, %s52
      %p61 = scmp.eq.s32.totalorder %s18, 1
      %p62 = por %p60, %p61
      %p63 = scmp.ne.s32.totalorder %s52, %s53
      %p64 = scmp.eq.s32.totalorder %s18, 0
      %p65 = por %p63, %p64
      %p66 = scmp.ne.s32.totalorder %s52, %s53
      %p67 = scmp.eq.s32.totalorder %s19, 1
      %p68 = por %p66, %p67
      %p70 = scmp.ne.s32.totalorder %s53, %s69
      %p71 = scmp.eq.s32.totalorder %s19, 0
      %p72 = por %p70, %p71
      %p73 = scmp.le.s32.totalorder 1, %s13
      %p74 = scmp.lt.s32.totalorder %s13, 3
      %p75 = pnand %p73, %p74
      %p76 = pneg %p75
      // Predicated region
      $region9: #{tpu_custom_call.1} parent=5 // pred_check
        _
      $region10: #{tpu_custom_call.1} parent=5 // pred_check_branch
        %78 = sbr.rel (%p75) target = $region12
      $region11: #{tpu_custom_call.1} parent=5 // pred_region
        %s79 = ssub.s32 %s13, 1
      $region12: #{tpu_custom_call.1} parent=5 // pred_fallthru
        _
      %p80 = scmp.lt.s32.totalorder %s13, 2
      // Predicated region
      $region13: #{tpu_custom_call.1} parent=5 // pred_check
        %p81 = pneg %p80
      $region14: #{tpu_custom_call.1} parent=5 // pred_check_branch
        %83 = sbr.rel (%p81) target = $region16
      $region15: #{tpu_custom_call.1} parent=5 // pred_region
        // Predicated region
        $region17: #{tpu_custom_call.1} parent=15 // pred_check
          %p84 = pneg %p33
        $region18: #{tpu_custom_call.1} parent=15 // pred_check_branch
          %86 = sbr.rel (%p84) target = $region20
        $region19: #{tpu_custom_call.1} parent=15 // pred_region
          %s87 = sand.u32 %s23, 1
          %s88 = scalar_lea.sflag [#allocation3], %s87
          %s89 = sand.u32 %s23, 1
          %s90 = smul.addr %s89, 8
          %s91 = scalar_lea.vmem [#allocation2], %s90
          %s93 = ssub.s32 128, 128
          %94 = vsyncadd %s88, %s93
          %s95 = smul.addr %s13, 128
          %s96 = scalar_lea.hbm %s0, %s95
          %s98 = sshll.u32 %s91, 4
          %s99 = int_to_ptr.vmem [resolvable:$true] %s98
          %101 = dma.hbm_to_vmem [thread:$0]  %s96, 128, %s99, %s88
        $region20: #{tpu_custom_call.1} parent=15 // pred_fallthru
          _
      $region16: #{tpu_custom_call.1} parent=5 // pred_fallthru
        _
      %p102 = scmp.le.s32.totalorder 1, %s13
      %p103 = scmp.lt.s32.totalorder %s13, 3
      %p104 = pnand %p102, %p103
      %p105 = pneg %p104
      // Predicated region
      $region21: #{tpu_custom_call.1} parent=5 // pred_check
        _
      $region22: #{tpu_custom_call.1} parent=5 // pred_check_branch
        %107 = sbr.rel (%p104) target = $region24
      $region23: #{tpu_custom_call.1} parent=5 // pred_region
        %s108 = ssub.s32 %s13, 1
        %s109 = sand.u32 %s26, 1
        %s110 = scalar_lea.sflag [#allocation3], %s109
        %s111 = sand.u32 %s26, 1
        %s112 = smul.addr %s111, 8
        %s113 = scalar_lea.vmem [#allocation2], %s112
        // Predicated region
        $region25: #{tpu_custom_call.1} parent=23 // pred_check
          %p114 = pneg %p39
        $region26: #{tpu_custom_call.1} parent=23 // pred_check_branch
          %116 = sbr.rel (%p114) target = $region28
        $region27: #{tpu_custom_call.1} parent=23 // pred_region
          %117 = dma.done %s110, 128
        $region28: #{tpu_custom_call.1} parent=23 // pred_fallthru
          _
        %s118 = sand.u32 %s26, 1
        %s119 = scalar_lea.sflag [#allocation3], %s118
        %s120 = sand.u32 %s26, 1
        %s121 = smul.addr %s120, 8
        %s122 = scalar_lea.vmem [#allocation2], %s121
        %p123 = pneg %p39
        %p124 = pneg %p36
        %p125 = pneg %p65
        %p126 = pneg %p62
        %s127 = sand.u32 %s52, 1
        %s128 = scalar_lea.sflag [#allocation4], %s127
        %s129 = sand.u32 %s52, 1
        %s130 = smul.addr %s129, 8
        %s131 = scalar_lea.vmem [#allocation5], %s130
        %v132 = vld [vmem:[%s113] sm:$0xff]
        %133 = vst [vmem:[%s131] sm:$0xff] %v132
        %s134 = sand.u32 %s52, 1
        %s135 = scalar_lea.sflag [#allocation4], %s134
        %s136 = sand.u32 %s52, 1
        %s137 = smul.addr %s136, 8
        %s138 = scalar_lea.vmem [#allocation5], %s137
        // Predicated region
        $region29: #{tpu_custom_call.1} parent=23 // pred_check
          %p139 = pneg %p62
        $region30: #{tpu_custom_call.1} parent=23 // pred_check_branch
          %141 = sbr.rel (%p139) target = $region32
        $region31: #{tpu_custom_call.1} parent=23 // pred_region
          %s143 = ssub.s32 128, 128
          %144 = vsyncadd %s135, %s143
          %s145 = smul.addr %s18, 128
          %s146 = scalar_lea.hbm %s1, %s145
          %s148 = sshll.u32 %s138, 4
          %s149 = int_to_ptr.vmem [resolvable:$true] %s148
          %151 = dma.vmem_to_hbm [thread:$0]  %s149, 128, %s146, %s135
        $region32: #{tpu_custom_call.1} parent=23 // pred_fallthru
          _
      $region24: #{tpu_custom_call.1} parent=5 // pred_fallthru
        _
      %p152 = scmp.le.s32.totalorder 2, %s13
      // Predicated region
      $region33: #{tpu_custom_call.1} parent=5 // pred_check
        %p153 = pneg %p152
      $region34: #{tpu_custom_call.1} parent=5 // pred_check_branch
        %155 = sbr.rel (%p153) target = $region36
      $region35: #{tpu_custom_call.1} parent=5 // pred_region
        %s156 = ssub.s32 %s13, 2
        // Predicated region
        $region37: #{tpu_custom_call.1} parent=35 // pred_check
          %p157 = pneg %p68
        $region38: #{tpu_custom_call.1} parent=35 // pred_check_branch
          %159 = sbr.rel (%p157) target = $region40
        $region39: #{tpu_custom_call.1} parent=35 // pred_region
          %s160 = sand.u32 %s53, 1
          %s161 = scalar_lea.sflag [#allocation4], %s160
          %s162 = sand.u32 %s53, 1
          %s163 = smul.addr %s162, 8
          %s164 = scalar_lea.vmem [#allocation5], %s163
          %165 = dma.done %s161, 128
        $region40: #{tpu_custom_call.1} parent=35 // pred_fallthru
          _
      $region36: #{tpu_custom_call.1} parent=5 // pred_fallthru
        _
    $region6: #{tpu_custom_call.1} parent=1 // loop_footer
      %s17 = sadd.s32 1, %s13
    $region7: #{tpu_custom_call.1} parent=1 // loop_footer_branch
      %12 = sbr.rel target = $region3
    $region8: #{tpu_custom_call.1} parent=1 // loop_exit
      _
    %166 = vsyncpa [#allocation3], 1
    %s167 = scalar_lea.sflag [#allocation3], 1
    %168 = vsyncpa %s167, 1
    %169 = vsyncpa [#allocation4], 1
    %s170 = scalar_lea.sflag [#allocation4], 1
    %171 = vsyncpa %s170, 1

</llo_original>
